<compile_context>
chip_gen: v7x
topology: tpu7x:2x2x1
jax: 0.10.0
libtpu: 0.0.40
codegen_flags: <defaults>
</compile_context>

<pallas_src>
import functools

import jax
import jax.numpy as jnp
from jax.experimental import pallas as pl
from jax.experimental.pallas import tpu as pltpu


# --------------------------------------------------------------------------
# Kernels
# --------------------------------------------------------------------------
def _fused_channel_gate_kernel(x_ref, w1t_ref, b1_ref, w2_ref, b2_ref, o_ref,
                               *, hw_valid, padded):
    """Single-pass per-image gate. x_ref/o_ref: (1, C, HWp)."""
    x = x_ref[0]                                   # (C, HWp), input dtype
    xf = x.astype(jnp.float32)

    # ---- global avg / max pooling (lane reductions; padding is zeros). ----
    s = jnp.sum(xf, axis=-1, keepdims=True)        # (C, 1)
    if padded:
        lane = jax.lax.broadcasted_iota(jnp.int32, xf.shape, 1)
        xm = jnp.where(lane < hw_valid, xf, -jnp.inf)
    else:
        xm = xf
    mx = jnp.max(xm, axis=-1, keepdims=True)       # (C, 1)
    avg = s * (1.0 / hw_valid)

    # ---- tiny shared MLP on VPU/XLU (no padded MXU matmul). ----
    w1t = w1t_ref[...]                             # (C, Cr)  == fc1.weight.T
    b1r = b1_ref[...]                              # (1, Cr)
    w2m = w2_ref[...]                              # (C, Cr)  == fc2.weight
    b2c = b2_ref[...]                              # (C, 1)

    def mlp(p):                                    # p: (C, 1)
        h = jnp.maximum(jnp.sum(w1t * p, axis=0, keepdims=True) + b1r, 0.0)  # (1, Cr)
        return jnp.sum(w2m * h, axis=1, keepdims=True) + b2c                 # (C, 1)

    scale = jax.nn.sigmoid(mlp(avg) + mlp(mx))     # (C, 1) f32

    # ---- streaming epilogue. ----
    o_ref[0] = (x_ref[0] * scale).astype(o_ref.dtype)


def _pool_kernel(x_ref, sum_ref, max_ref, *, hw_valid, tile, padded):
    """Tiled pooling pass. x_ref: (1, C, T); sum/max outputs (1, C, 1) are
    resident accumulators across the hw ("arbitrary") grid axis."""
    h = pl.program_id(1)

    @pl.when(h == 0)
    def _():
        sum_ref[...] = jnp.zeros(sum_ref.shape, sum_ref.dtype)
        max_ref[...] = jnp.full(max_ref.shape, -jnp.inf, max_ref.dtype)

    x = x_ref[0].astype(jnp.float32)               # (C, T)
    sum_ref[0] += jnp.sum(x, axis=-1, keepdims=True)   # zero padding is harmless

    if padded:
        lane = jax.lax.broadcasted_iota(jnp.int32, x.shape, 1) + h * tile
        x = jnp.where(lane < hw_valid, x, -jnp.inf)
    max_ref[0] = jnp.maximum(max_ref[0], jnp.max(x, axis=-1, keepdims=True))


def _apply_kernel(x_ref, scale_ref, o_ref):
    """Tiled gate application. x_ref/o_ref: (1, C, T); scale_ref: (1, C, 1)."""
    o_ref[0] = (x_ref[0] * scale_ref[0]).astype(o_ref.dtype)


# --------------------------------------------------------------------------
# Wrapper
# --------------------------------------------------------------------------
def _round_up(a, m):
    return (a + m - 1) // m * m


def _vmem_budget_bytes():
    """Per-generation VMEM budget with ~25% headroom (feedback #2/#3)."""
    try:
        cap = int(pltpu.get_tpu_info().vmem_capacity_bytes)
    except Exception:
        cap = 64 * 1024 * 1024        # conservative (v7x per-TC) fallback
    return cap * 3 // 4               # 48 MiB on v7x, 96 MiB on v5e/v6e


def channel_gate(x_nchw, w1, b1, w2, b2, *, mode="auto", max_hw_tile=None):
    """x_nchw: (N, C, H, W) float. Returns x * sigmoid(mlp(avg) + mlp(max)).

    w1: (Cr, C), b1: (Cr,), w2: (C, Cr), b2: (C,)  (torch Linear layout).
    mode: "auto" | "fused" | "tiled".
    """
    N, C, H, W = x_nchw.shape
    HW = H * W
    Cr = w1.shape[0]
    itemsize = jnp.dtype(x_nchw.dtype).itemsize
    budget = _vmem_budget_bytes()

    x_flat = x_nchw.reshape(N, C, HW)
    HW128 = _round_up(HW, 128)        # lane-dense last dim (feedback #6)

    # ~4 blocks of (C, HW128) live at once in the fused path (double-buffered
    # in + out), plus the tiny weights.
    weight_bytes = 4 * (w1.size + w2.size + b1.size + b2.size)
    fused_bytes = 4 * C * HW128 * itemsize + 2 * weight_bytes
    if mode == "fused":
        use_fused = True
    elif mode == "tiled":
        use_fused = False
    else:
        use_fused = fused_bytes <= budget // 2

    # ---------------------------------------------------------------- fused
    if use_fused:
        HWp = HW128
        xp = x_flat if HWp == HW else jnp.pad(x_flat, ((0, 0), (0, 0), (0, HWp - HW)))
        kernel = functools.partial(_fused_channel_gate_kernel,
                                   hw_valid=HW, padded=(HWp != HW))
        out = pl.pallas_call(
            kernel,
            out_shape=jax.ShapeDtypeStruct((N, C, HWp), x_nchw.dtype),
            grid_spec=pltpu.PrefetchScalarGridSpec(
                num_scalar_prefetch=0,
                grid=(N,),
                in_specs=[
                    pl.BlockSpec((1, C, HWp), lambda n: (n, 0, 0)),   # x
                    pl.BlockSpec((C, Cr), lambda n: (0, 0)),          # fc1.weight.T
                    pl.BlockSpec((1, Cr), lambda n: (0, 0)),          # fc1.bias row
                    pl.BlockSpec((C, Cr), lambda n: (0, 0)),          # fc2.weight
                    pl.BlockSpec((C, 1), lambda n: (0, 0)),           # fc2.bias col
                ],
                out_specs=pl.BlockSpec((1, C, HWp), lambda n: (n, 0, 0)),
            ),
            compiler_params=pltpu.CompilerParams(
                dimension_semantics=("parallel",),        # N >= 2 -> both v7x TCs busy
                vmem_limit_bytes=int(budget),
            ),
            cost_estimate=pl.CostEstimate(
                flops=int(3 * N * C * HWp + 8 * N * C * Cr),
                transcendentals=int(N * C),
                bytes_accessed=int(2 * N * C * HWp * itemsize + weight_bytes),
            ),
        )(xp, w1.T, b1.reshape(1, Cr), w2, b2.reshape(C, 1))
        if HWp != HW:
            out = out[..., :HW]
        return out.reshape(N, C, H, W)

    # ---------------------------------------------------------------- tiled
    # HW tile: multiple of 128, sized so ~4 double-buffered tiles stay well
    # inside the budget; capped at 2048 lanes (>= measured roofline plateau).
    t_vmem = max(128, (budget // (8 * C * itemsize)) // 128 * 128)
    T = min(HW128, 2048, t_vmem)
    if max_hw_tile is not None:
        T = min(T, max(128, (max_hw_tile // 128) * 128))
    HWp = _round_up(HW, T)            # pad to an exact multiple of the tile
    n_hw = HWp // T
    xp = x_flat if HWp == HW else jnp.pad(x_flat, ((0, 0), (0, 0), (0, HWp - HW)))

    # 1) pooling pass (hw axis "arbitrary", outputs are resident accumulators)
    pool_kernel = functools.partial(_pool_kernel, hw_valid=HW, tile=T,
                                    padded=(HWp != HW))
    sum_nc, max_nc = pl.pallas_call(
        pool_kernel,
        out_shape=(jax.ShapeDtypeStruct((N, C, 1), jnp.float32),
                   jax.ShapeDtypeStruct((N, C, 1), jnp.float32)),
        grid_spec=pltpu.PrefetchScalarGridSpec(
            num_scalar_prefetch=0,
            grid=(N, n_hw),
            in_specs=[pl.BlockSpec((1, C, T), lambda n, h: (n, 0, h))],
            out_specs=[pl.BlockSpec((1, C, 1), lambda n, h: (n, 0, 0)),
                       pl.BlockSpec((1, C, 1), lambda n, h: (n, 0, 0))],
        ),
        compiler_params=pltpu.CompilerParams(
            dimension_semantics=("parallel", "arbitrary"),
            vmem_limit_bytes=int(budget),
        ),
        cost_estimate=pl.CostEstimate(
            flops=int(2 * N * C * HWp),
            transcendentals=0,
            bytes_accessed=int(N * C * HWp * itemsize + 2 * N * C * 4),
        ),
    )(xp)

    # 2) tiny shared MLP + sigmoid as plain XLA (off the HBM roofline).
    avg = sum_nc[..., 0] * (1.0 / HW)              # (N, C) f32
    mx = max_nc[..., 0]                            # (N, C) f32

    def mlp(p):
        h = jnp.maximum(p @ w1.T + b1, 0.0)
        return h @ w2.T + b2

    scale = jax.nn.sigmoid(mlp(avg) + mlp(mx)).astype(jnp.float32)
    scale = scale.reshape(N, C, 1)

    # 3) streaming gate application (fully parallel, lane-dense tiles).
    out = pl.pallas_call(
        _apply_kernel,
        out_shape=jax.ShapeDtypeStruct((N, C, HWp), x_nchw.dtype),
        grid_spec=pltpu.PrefetchScalarGridSpec(
            num_scalar_prefetch=0,
            grid=(N, n_hw),
            in_specs=[pl.BlockSpec((1, C, T), lambda n, h: (n, 0, h)),
                      pl.BlockSpec((1, C, 1), lambda n, h: (n, 0, 0))],
            out_specs=pl.BlockSpec((1, C, T), lambda n, h: (n, 0, h)),
        ),
        compiler_params=pltpu.CompilerParams(
            dimension_semantics=("parallel", "parallel"),
            vmem_limit_bytes=int(budget),
        ),
        cost_estimate=pl.CostEstimate(
            flops=int(N * C * HWp),
            transcendentals=0,
            bytes_accessed=int(2 * N * C * HWp * itemsize + N * C * 4),
        ),
    )(xp, scale)

    if HWp != HW:
        out = out[..., :HW]
    return out.reshape(N, C, H, W)


# --------------------------------------------------------------------------
# Plain-JAX reference (mirrors the PyTorch ChannelGate with ['avg','max'])
# --------------------------------------------------------------------------
def channel_gate_ref(x, w1, b1, w2, b2):
    avg_p = jnp.mean(x, axis=(2, 3))               # (N, C)
    max_p = jnp.max(x, axis=(2, 3))                # (N, C)

    def mlp(p):
        h = jnp.maximum(p @ w1.T + b1, 0.0)
        return h @ w2.T + b2

    att = mlp(avg_p) + mlp(max_p)                  # (N, C)
    scale = jax.nn.sigmoid(att)[:, :, None, None]
    return x * scale


if __name__ == "__main__":
    N, C, H, W = 2, 64, 16, 16
    reduction_ratio = 16
    Cr = C // reduction_ratio

    key = jax.random.PRNGKey(0)
    kx, k1, k2, k3, k4 = jax.random.split(key, 5)

    x = jax.random.normal(kx, (N, C, H, W), dtype=jnp.float32)
    # Deterministic synthetic parameters (torch Linear weight layout: (out, in)).
    w1 = jax.random.normal(k1, (Cr, C), dtype=jnp.float32) * 0.1
    b1 = jax.random.normal(k2, (Cr,), dtype=jnp.float32) * 0.1
    w2 = jax.random.normal(k3, (C, Cr), dtype=jnp.float32) * 0.1
    b2 = jax.random.normal(k4, (C,), dtype=jnp.float32) * 0.1

    ref = channel_gate_ref(x, w1, b1, w2, b2)

    # 1) auto -> fused single-pass kernel (image fits in VMEM).
    out = jax.block_until_ready(channel_gate(x, w1, b1, w2, b2))
    assert out.shape == (N, C, H, W)
    assert jnp.allclose(out, ref, atol=1e-5, rtol=1e-5), "fused path mismatch"

    # 2) forced two-pass tiled path on the same data.
    out_t = jax.block_until_ready(channel_gate(x, w1, b1, w2, b2, mode="tiled"))
    assert jnp.allclose(out_t, ref, atol=1e-5, rtol=1e-5), "tiled path mismatch"

    # 3) tiled path with multiple HW tiles + lane padding + odd batch size.
    N2, H2, W2 = 3, 20, 20
    x2 = jax.random.normal(kx, (N2, C, H2, W2), dtype=jnp.float32)
    ref2 = channel_gate_ref(x2, w1, b1, w2, b2)
    out2 = jax.block_until_ready(
        channel_gate(x2, w1, b1, w2, b2, mode="tiled", max_hw_tile=128))
    assert jnp.allclose(out2, ref2, atol=1e-5, rtol=1e-5), "multi-tile mismatch"

    # 4) bf16 I/O through the fused path (f32 accumulation inside the kernel),
    #    with non-128-multiple HW to exercise the lane-padding mask.
    x4 = jax.random.normal(kx, (2, C, 14, 14), dtype=jnp.bfloat16)
    ref4 = channel_gate_ref(x4.astype(jnp.float32), w1, b1, w2, b2)
    out4 = jax.block_until_ready(
        channel_gate(x4, w1, b1, w2, b2, mode="fused")).astype(jnp.float32)
    assert jnp.allclose(out4, ref4, atol=3e-2, rtol=3e-2), "bf16 path mismatch"

    print("KERNEL_OK")
</pallas_src>

<mosaic_0001>
module attributes {stable_mosaic.version = 11 : i64} {
  func.func @_fused_channel_gate_kernel(%arg0: i32, %arg1: memref<1x64x256xf32, #tpu.memory_space<vmem>>, %arg2: memref<64x4xf32, #tpu.memory_space<vmem>>, %arg3: memref<1x4xf32, #tpu.memory_space<vmem>>, %arg4: memref<64x4xf32, #tpu.memory_space<vmem>>, %arg5: memref<64x1xf32, #tpu.memory_space<vmem>>, %arg6: memref<1x64x256xf32, #tpu.memory_space<vmem>>) attributes {dimension_semantics = [#tpu.dimension_semantics<parallel>], iteration_bounds = array<i64: 2>, scalar_prefetch = 0 : i64, scratch_operands = 0 : i64, tpu.core_type = #tpu.core_type<tc>, window_params = [{transform_indices = @transform_0, window_bounds = array<i64: 1, 64, 256>}, {pipeline_mode = #tpu.pipeline_mode<synchronous>, transform_indices = @transform_1, window_bounds = array<i64: 64, 4>}, {pipeline_mode = #tpu.pipeline_mode<synchronous>, transform_indices = @transform_2, window_bounds = array<i64: 1, 4>}, {pipeline_mode = #tpu.pipeline_mode<synchronous>, transform_indices = @transform_3, window_bounds = array<i64: 64, 4>}, {pipeline_mode = #tpu.pipeline_mode<synchronous>, transform_indices = @transform_4, window_bounds = array<i64: 64, 1>}, {transform_indices = @transform_5, window_bounds = array<i64: 1, 64, 256>}]} {
    %c0 = arith.constant 0 : index
    %c0_0 = arith.constant 0 : index
    %c0_1 = arith.constant 0 : index
    %0 = vector.load %arg1[%c0, %c0_0, %c0_1] : memref<1x64x256xf32, #tpu.memory_space<vmem>>, vector<1x64x256xf32>
    %1 = vector.shape_cast %0 : vector<1x64x256xf32> to vector<64x256xf32>
    %cst = arith.constant dense<0.000000e+00> : vector<64xf32>
    %2 = vector.multi_reduction <add>, %1, %cst [1] : vector<64x256xf32> to vector<64xf32>
    %3 = vector.shape_cast %2 : vector<64xf32> to vector<64x1xf32>
    %cst_2 = arith.constant dense<0xFF800000> : vector<64xf32>
    %4 = vector.multi_reduction <maximumf>, %1, %cst_2 [1] : vector<64x256xf32> to vector<64xf32>
    %5 = vector.shape_cast %4 : vector<64xf32> to vector<64x1xf32>
    %cst_3 = arith.constant 3.906250e-03 : f32
    %6 = vector.broadcast %cst_3 : f32 to vector<64x1xf32>
    %7 = arith.mulf %3, %6 : vector<64x1xf32>
    %c0_4 = arith.constant 0 : index
    %c0_5 = arith.constant 0 : index
    %8 = vector.load %arg2[%c0_4, %c0_5] : memref<64x4xf32, #tpu.memory_space<vmem>>, vector<64x4xf32>
    %c0_6 = arith.constant 0 : index
    %c0_7 = arith.constant 0 : index
    %9 = vector.load %arg3[%c0_6, %c0_7] : memref<1x4xf32, #tpu.memory_space<vmem>>, vector<1x4xf32>
    %c0_8 = arith.constant 0 : index
    %c0_9 = arith.constant 0 : index
    %10 = vector.load %arg4[%c0_8, %c0_9] : memref<64x4xf32, #tpu.memory_space<vmem>>, vector<64x4xf32>
    %c0_10 = arith.constant 0 : index
    %c0_11 = arith.constant 0 : index
    %11 = vector.load %arg5[%c0_10, %c0_11] : memref<64x1xf32, #tpu.memory_space<vmem>>, vector<64x1xf32>
    %12 = vector.broadcast %7 : vector<64x1xf32> to vector<64x4xf32>
    %13 = arith.mulf %8, %12 : vector<64x4xf32>
    %cst_12 = arith.constant dense<0.000000e+00> : vector<4xf32>
    %14 = vector.multi_reduction <add>, %13, %cst_12 [0] : vector<64x4xf32> to vector<4xf32>
    %15 = vector.shape_cast %14 : vector<4xf32> to vector<1x4xf32>
    %16 = arith.addf %15, %9 : vector<1x4xf32>
    %cst_13 = arith.constant 0.000000e+00 : f32
    %17 = vector.broadcast %cst_13 : f32 to vector<1x4xf32>
    %18 = arith.maximumf %16, %17 : vector<1x4xf32>
    %19 = vector.broadcast %18 : vector<1x4xf32> to vector<64x4xf32>
    %20 = arith.mulf %10, %19 : vector<64x4xf32>
    %cst_14 = arith.constant dense<0.000000e+00> : vector<64xf32>
    %21 = vector.multi_reduction <add>, %20, %cst_14 [1] : vector<64x4xf32> to vector<64xf32>
    %22 = vector.shape_cast %21 : vector<64xf32> to vector<64x1xf32>
    %23 = arith.addf %22, %11 : vector<64x1xf32>
    %24 = vector.broadcast %5 : vector<64x1xf32> to vector<64x4xf32>
    %25 = arith.mulf %8, %24 : vector<64x4xf32>
    %cst_15 = arith.constant dense<0.000000e+00> : vector<4xf32>
    %26 = vector.multi_reduction <add>, %25, %cst_15 [0] : vector<64x4xf32> to vector<4xf32>
    %27 = vector.shape_cast %26 : vector<4xf32> to vector<1x4xf32>
    %28 = arith.addf %27, %9 : vector<1x4xf32>
    %cst_16 = arith.constant 0.000000e+00 : f32
    %29 = vector.broadcast %cst_16 : f32 to vector<1x4xf32>
    %30 = arith.maximumf %28, %29 : vector<1x4xf32>
    %31 = vector.broadcast %30 : vector<1x4xf32> to vector<64x4xf32>
    %32 = arith.mulf %10, %31 : vector<64x4xf32>
    %cst_17 = arith.constant dense<0.000000e+00> : vector<64xf32>
    %33 = vector.multi_reduction <add>, %32, %cst_17 [1] : vector<64x4xf32> to vector<64xf32>
    %34 = vector.shape_cast %33 : vector<64xf32> to vector<64x1xf32>
    %35 = arith.addf %34, %11 : vector<64x1xf32>
    %36 = arith.addf %23, %35 : vector<64x1xf32>
    %37 = arith.negf %36 : vector<64x1xf32>
    %38 = math.exp %37 : vector<64x1xf32>
    %cst_18 = arith.constant 1.000000e+00 : f32
    %39 = vector.broadcast %cst_18 : f32 to vector<64x1xf32>
    %40 = arith.addf %39, %38 : vector<64x1xf32>
    %41 = arith.divf %39, %40 : vector<64x1xf32>
    %c0_19 = arith.constant 0 : index
    %c0_20 = arith.constant 0 : index
    %c0_21 = arith.constant 0 : index
    %42 = vector.load %arg1[%c0_19, %c0_20, %c0_21] : memref<1x64x256xf32, #tpu.memory_space<vmem>>, vector<1x64x256xf32>
    %43 = vector.shape_cast %42 : vector<1x64x256xf32> to vector<64x256xf32>
    %44 = vector.broadcast %41 : vector<64x1xf32> to vector<64x256xf32>
    %45 = arith.mulf %43, %44 : vector<64x256xf32>
    %c0_22 = arith.constant 0 : index
    %c0_23 = arith.constant 0 : index
    %c0_24 = arith.constant 0 : index
    %46 = vector.load %arg6[%c0_22, %c0_23, %c0_24] : memref<1x64x256xf32, #tpu.memory_space<vmem>>, vector<1x64x256xf32>
    %47 = vector.shape_cast %46 : vector<1x64x256xf32> to vector<64x256xf32>
    %48 = vector.shape_cast %45 : vector<64x256xf32> to vector<1x64x256xf32>
    tpu.vector_store %arg6[%c0_22, %c0_23, %c0_24], %48 {strides = array<i32>} : memref<1x64x256xf32, #tpu.memory_space<vmem>>, vector<1x64x256xf32>,
    return
  }
  func.func @transform_0(%arg0: i32) -> (i32, i32, i32) {
    %c0_i32 = arith.constant 0 : i32
    %c0_i32_0 = arith.constant 0 : i32
    %c0_i32_1 = arith.constant 0 : i32
    return %arg0, %c0_i32, %c0_i32_0 : i32, i32, i32
  }
  func.func @transform_1(%arg0: i32) -> (i32, i32) {
    %c0_i32 = arith.constant 0 : i32
    %c0_i32_0 = arith.constant 0 : i32
    %c0_i32_1 = arith.constant 0 : i32
    return %c0_i32, %c0_i32_0 : i32, i32
  }
  func.func @transform_2(%arg0: i32) -> (i32, i32) {
    %c0_i32 = arith.constant 0 : i32
    %c0_i32_0 = arith.constant 0 : i32
    %c0_i32_1 = arith.constant 0 : i32
    return %c0_i32, %c0_i32_0 : i32, i32
  }
  func.func @transform_3(%arg0: i32) -> (i32, i32) {
    %c0_i32 = arith.constant 0 : i32
    %c0_i32_0 = arith.constant 0 : i32
    %c0_i32_1 = arith.constant 0 : i32
    return %c0_i32, %c0_i32_0 : i32, i32
  }
  func.func @transform_4(%arg0: i32) -> (i32, i32) {
    %c0_i32 = arith.constant 0 : i32
    %c0_i32_0 = arith.constant 0 : i32
    %c0_i32_1 = arith.constant 0 : i32
    return %c0_i32, %c0_i32_0 : i32, i32
  }
  func.func @transform_5(%arg0: i32) -> (i32, i32, i32) {
    %c0_i32 = arith.constant 0 : i32
    %c0_i32_0 = arith.constant 0 : i32
    %c0_i32_1 = arith.constant 0 : i32
    return %arg0, %c0_i32, %c0_i32_0 : i32, i32, i32
  }
}

</mosaic_0001>

<llo_original>
// kernel: tpu_custom_call.1
$region0: #{tpu_custom_call.1}
  #allocation0 [shape = 'u32[]', space=smem, size = 0x4, offset = 0x4, fixed_abs, tag = 'smem constant byte address 0x4 - core index']
  #allocation1 [shape = 'u32[144,128]{1,0:T(1,128)}', space=vmem, size = 0x12000, scoped, tag = 'internal scratch']
  %s0 = inlined_call_operand.hbm [shape: f32[2,64,256], index: 0, kind: input, shape index: {}]
  %s1 = inlined_call_operand.vmem [shape: f32[64,4], index: 1, kind: input, shape index: {}]
  %s2 = inlined_call_operand.vmem [shape: f32[1,4], index: 2, kind: input, shape index: {}]
  %s3 = inlined_call_operand.vmem [shape: f32[64,4], index: 3, kind: input, shape index: {}]
  %s4 = inlined_call_operand.vmem [shape: f32[64,1], index: 4, kind: input, shape index: {}]
  %s5 = inlined_call_operand.hbm [shape: f32[2,64,256], index: 5, kind: output, shape index: {}]
  %s6 = sld [smem:[#allocation0]]
  $region57: #{tpu_custom_call.1} parent=0
    _
  %s8 = ssub.s32 1, %s6
  %s9 = scalar_select 0, %s8, %s6
  $region1: #{tpu_custom_call.1} parent=0
    #allocation2 [shape = 'u8[131072]{0}', space=vmem, size = 0x20000, scoped, tag = 'input window, operand 0']
    #allocation3 [shape = 's32[2]{0}', space=sflag, size = 0x8, scoped, tag = 'scoped memory for tpu_custom_call.1']
    #allocation4 [shape = 's32[2]{0}', space=sflag, size = 0x8, scoped, tag = 'scoped memory for tpu_custom_call.1']
    #allocation5 [shape = 'u8[131072]{0}', space=vmem, size = 0x20000, scoped, tag = 'output window, operand 0']
    %10 = vsyncpa [#allocation3], 0
    %s11 = scalar_lea.sflag [#allocation3], 1
    %12 = vsyncpa %s11, 0
    %13 = vsyncpa [#allocation4], 0
    %s14 = scalar_lea.sflag [#allocation4], 1
    %15 = vsyncpa %s14, 0
    loop: start=0, step=1, limit=4
    $region2: #{tpu_custom_call.1} parent=1 // loop_pre_header
      _
    $region3: #{tpu_custom_call.1} parent=1 // loop_header
      %s17 = sphi 0, %s21
      %p18 = scmp.ge.s32.totalorder %s17, 4
      %s27 = sphi 0, %s29
      %s30 = sphi 0, %s27
      %s31 = sphi 0, %s30
      %s47 = sphi 0, %s31
      %s51 = sphi 0, %s51
      %s53 = sphi 0, %s51
      %s54 = sphi 0, %s53
      %s68 = sphi 0, %s54
      %s72 = sphi 0, %s72
      %s74 = sphi 0, %s72
      %s75 = sphi 0, %s74
      %s89 = sphi 0, %s75
      %s93 = sphi 0, %s93
      %s95 = sphi 0, %s93
      %s96 = sphi 0, %s95
      %s110 = sphi 0, %s96
      %s114 = sphi 0, %s114
      %s116 = sphi 0, %s114
      %s117 = sphi 0, %s116
      %s131 = sphi 0, %s117
      %s137 = sphi 0, %s139
      %s140 = sphi 0, %s137
      %s141 = sphi 0, %s140
      %s157 = sphi 0, %s141
    $region4: #{tpu_custom_call.1} parent=1 // loop_header_branch
      %20 = sbr.rel (%p18) target = $region8
    $region5: #{tpu_custom_call.1} parent=1 // loop_body
      %s22 = ssub.s32 %s17, 1
      %s23 = ssub.s32 %s17, 2
      %s24 = sadd.s32 %s17, 1
      %s25 = ssub.s32 %s17, %s24
      %p26 = scmp.eq.s32.totalorder %s25, 0
      %s28 = sadd.s32 %s27, 1
      %s29 = scalar_select %p26, %s27, %s28
      %p32 = pneg %p26
      %p33 = scmp.eq.s32.totalorder %s17, 1
      %p34 = por %p32, %p33
      %p35 = scmp.ne.s32.totalorder %s27, %s30
      %p36 = scmp.eq.s32.totalorder %s17, 0
      %p37 = por %p35, %p36
      %p38 = scmp.ne.s32.totalorder %s27, %s30
      %p39 = scmp.eq.s32.totalorder %s22, 1
      %p40 = por %p38, %p39
      %p41 = scmp.ne.s32.totalorder %s30, %s31
      %p42 = scmp.eq.s32.totalorder %s22, 0
      %p43 = por %p41, %p42
      %p44 = scmp.ne.s32.totalorder %s30, %s31
      %p45 = scmp.eq.s32.totalorder %s23, 1
      %p46 = por %p44, %p45
      %p48 = scmp.ne.s32.totalorder %s31, %s47
      %p49 = scmp.eq.s32.totalorder %s23, 0
      %p50 = por %p48, %p49
      %s52 = sadd.s32 %s51, 1
      %p55 = scmp.eq.s32.totalorder %s17, 1
      %p56 = scmp.ne.s32.totalorder %s51, %s53
      %p57 = scmp.eq.s32.totalorder %s17, 0
      %p58 = por %p56, %p57
      %p59 = scmp.ne.s32.totalorder %s51, %s53
      %p60 = scmp.eq.s32.totalorder %s22, 1
      %p61 = por %p59, %p60
      %p62 = scmp.ne.s32.totalorder %s53, %s54
      %p63 = scmp.eq.s32.totalorder %s22, 0
      %p64 = por %p62, %p63
      %p65 = scmp.ne.s32.totalorder %s53, %s54
      %p66 = scmp.eq.s32.totalorder %s23, 1
      %p67 = por %p65, %p66
      %p69 = scmp.ne.s32.totalorder %s54, %s68
      %p70 = scmp.eq.s32.totalorder %s23, 0
      %p71 = por %p69, %p70
      %s73 = sadd.s32 %s72, 1
      %p76 = scmp.eq.s32.totalorder %s17, 1
      %p77 = scmp.ne.s32.totalorder %s72, %s74
      %p78 = scmp.eq.s32.totalorder %s17, 0
      %p79 = por %p77, %p78
      %p80 = scmp.ne.s32.totalorder %s72, %s74
      %p81 = scmp.eq.s32.totalorder %s22, 1
      %p82 = por %p80, %p81
      %p83 = scmp.ne.s32.totalorder %s74, %s75
      %p84 = scmp.eq.s32.totalorder %s22, 0
      %p85 = por %p83, %p84
      %p86 = scmp.ne.s32.totalorder %s74, %s75
      %p87 = scmp.eq.s32.totalorder %s23, 1
      %p88 = por %p86, %p87
      %p90 = scmp.ne.s32.totalorder %s75, %s89
      %p91 = scmp.eq.s32.totalorder %s23, 0
      %p92 = por %p90, %p91
      %s94 = sadd.s32 %s93, 1
      %p97 = scmp.eq.s32.totalorder %s17, 1
      %p98 = scmp.ne.s32.totalorder %s93, %s95
      %p99 = scmp.eq.s32.totalorder %s17, 0
      %p100 = por %p98, %p99
      %p101 = scmp.ne.s32.totalorder %s93, %s95
      %p102 = scmp.eq.s32.totalorder %s22, 1
      %p103 = por %p101, %p102
      %p104 = scmp.ne.s32.totalorder %s95, %s96
      %p105 = scmp.eq.s32.totalorder %s22, 0
      %p106 = por %p104, %p105
      %p107 = scmp.ne.s32.totalorder %s95, %s96
      %p108 = scmp.eq.s32.totalorder %s23, 1
      %p109 = por %p107, %p108
      %p111 = scmp.ne.s32.totalorder %s96, %s110
      %p112 = scmp.eq.s32.totalorder %s23, 0
      %p113 = por %p111, %p112
      %s115 = sadd.s32 %s114, 1
      %p118 = scmp.eq.s32.totalorder %s17, 1
      %p119 = scmp.ne.s32.totalorder %s114, %s116
      %p120 = scmp.eq.s32.totalorder %s17, 0
      %p121 = por %p119, %p120
      %p122 = scmp.ne.s32.totalorder %s114, %s116
      %p123 = scmp.eq.s32.totalorder %s22, 1
      %p124 = por %p122, %p123
      %p125 = scmp.ne.s32.totalorder %s116, %s117
      %p126 = scmp.eq.s32.totalorder %s22, 0
      %p127 = por %p125, %p126
      %p128 = scmp.ne.s32.totalorder %s116, %s117
      %p129 = scmp.eq.s32.totalorder %s23, 1
      %p130 = por %p128, %p129
      %p132 = scmp.ne.s32.totalorder %s117, %s131
      %p133 = scmp.eq.s32.totalorder %s23, 0
      %p134 = por %p132, %p133
      %s135 = ssub.s32 %s17, %s24
      %p136 = scmp.eq.s32.totalorder %s135, 0
      %s138 = sadd.s32 %s137, 1
      %s139 = scalar_select %p136, %s137, %s138
      %p142 = pneg %p136
      %p143 = scmp.eq.s32.totalorder %s17, 1
      %p144 = por %p142, %p143
      %p145 = scmp.ne.s32.totalorder %s137, %s140
      %p146 = scmp.eq.s32.totalorder %s17, 0
      %p147 = por %p145, %p146
      %p148 = scmp.ne.s32.totalorder %s137, %s140
      %p149 = scmp.eq.s32.totalorder %s22, 1
      %p150 = por %p148, %p149
      %p151 = scmp.ne.s32.totalorder %s140, %s141
      %p152 = scmp.eq.s32.totalorder %s22, 0
      %p153 = por %p151, %p152
      %p154 = scmp.ne.s32.totalorder %s140, %s141
      %p155 = scmp.eq.s32.totalorder %s23, 1
      %p156 = por %p154, %p155
      %p158 = scmp.ne.s32.totalorder %s141, %s157
      %p159 = scmp.eq.s32.totalorder %s23, 0
      %p160 = por %p158, %p159
      %p161 = scmp.le.s32.totalorder 1, %s17
      %p162 = scmp.lt.s32.totalorder %s17, 3
      %p163 = pnand %p161, %p162
      %p164 = pneg %p163
      // Predicated region
      $region9: #{tpu_custom_call.1} parent=5 // pred_check
        _
      $region10: #{tpu_custom_call.1} parent=5 // pred_check_branch
        %166 = sbr.rel (%p163) target = $region12
      $region11: #{tpu_custom_call.1} parent=5 // pred_region
        %s167 = ssub.s32 %s17, 1
        // Predicated region
        $region13: #{tpu_custom_call.1} parent=11 // pred_check
          %p168 = pneg %p64
        $region14: #{tpu_custom_call.1} parent=11 // pred_check_branch
          %170 = sbr.rel (%p168) target = $region16
        $region15: #{tpu_custom_call.1} parent=11 // pred_region
          _
        $region16: #{tpu_custom_call.1} parent=11 // pred_fallthru
          _
        // Predicated region
        $region17: #{tpu_custom_call.1} parent=11 // pred_check
          %p171 = pneg %p85
        $region18: #{tpu_custom_call.1} parent=11 // pred_check_branch
          %173 = sbr.rel (%p171) target = $region20
        $region19: #{tpu_custom_call.1} parent=11 // pred_region
          _
        $region20: #{tpu_custom_call.1} parent=11 // pred_fallthru
          _
        // Predicated region
        $region21: #{tpu_custom_call.1} parent=11 // pred_check
          %p174 = pneg %p106
        $region22: #{tpu_custom_call.1} parent=11 // pred_check_branch
          %176 = sbr.rel (%p174) target = $region24
        $region23: #{tpu_custom_call.1} parent=11 // pred_region
          _
        $region24: #{tpu_custom_call.1} parent=11 // pred_fallthru
          _
        // Predicated region
        $region25: #{tpu_custom_call.1} parent=11 // pred_check
          %p177 = pneg %p127
        $region26: #{tpu_custom_call.1} parent=11 // pred_check_branch
          %179 = sbr.rel (%p177) target = $region28
        $region27: #{tpu_custom_call.1} parent=11 // pred_region
          _
        $region28: #{tpu_custom_call.1} parent=11 // pred_fallthru
          _
      $region12: #{tpu_custom_call.1} parent=5 // pred_fallthru
        _
      %p180 = scmp.lt.s32.totalorder %s17, 2
      // Predicated region
      $region29: #{tpu_custom_call.1} parent=5 // pred_check
        %p181 = pneg %p180
      $region30: #{tpu_custom_call.1} parent=5 // pred_check_branch
        %183 = sbr.rel (%p181) target = $region32
      $region31: #{tpu_custom_call.1} parent=5 // pred_region
        // Predicated region
        $region33: #{tpu_custom_call.1} parent=31 // pred_check
          %p184 = pneg %p37
        $region34: #{tpu_custom_call.1} parent=31 // pred_check_branch
          %186 = sbr.rel (%p184) target = $region36
        $region35: #{tpu_custom_call.1} parent=31 // pred_region
          %s187 = sand.u32 %s27, 1
          %s188 = scalar_lea.sflag [#allocation3], %s187
          %s189 = sand.u32 %s27, 1
          %s190 = smul.addr %s189, 128
          %s191 = scalar_lea.vmem [#allocation2], %s190
          %s193 = ssub.s32 2048, 2048
          %194 = vsyncadd %s188, %s193
          %s195 = smul.addr %s17, 16
          %s196 = smul.addr %s195, 128
          %s197 = scalar_lea.hbm %s0, %s196
          %s198 = sshll.u32 %s191, 4
          %s199 = int_to_ptr.vmem [resolvable:$true] %s198
          %204 = dma.hbm_to_vmem [thread:$0]  %s197, 2048, %s199, %s188, 256, 256, 16
        $region36: #{tpu_custom_call.1} parent=31 // pred_fallthru
          _
      $region32: #{tpu_custom_call.1} parent=5 // pred_fallthru
        _
      %p205 = scmp.le.s32.totalorder 1, %s17
      %p206 = scmp.lt.s32.totalorder %s17, 3
      %p207 = pnand %p205, %p206
      %p208 = pneg %p207
      // Predicated region
      $region37: #{tpu_custom_call.1} parent=5 // pred_check
        _
      $region38: #{tpu_custom_call.1} parent=5 // pred_check_branch
        %210 = sbr.rel (%p207) target = $region40
      $region39: #{tpu_custom_call.1} parent=5 // pred_region
        %s211 = ssub.s32 %s17, 1
        %s212 = sand.u32 %s30, 1
        %s213 = scalar_lea.sflag [#allocation3], %s212
        %s214 = sand.u32 %s30, 1
        %s215 = smul.addr %s214, 128
        %s216 = scalar_lea.vmem [#allocation2], %s215
        // Predicated region
        $region41: #{tpu_custom_call.1} parent=39 // pred_check
          %p217 = pneg %p43
        $region42: #{tpu_custom_call.1} parent=39 // pred_check_branch
          %219 = sbr.rel (%p217) target = $region44
        $region43: #{tpu_custom_call.1} parent=39 // pred_region
          %220 = dma.done %s213, 2048
        $region44: #{tpu_custom_call.1} parent=39 // pred_fallthru
          _
        %s221 = sand.u32 %s30, 1
        %s222 = scalar_lea.sflag [#allocation3], %s221
        %s223 = sand.u32 %s30, 1
        %s224 = smul.addr %s223, 128
        %s225 = scalar_lea.vmem [#allocation2], %s224
        %p226 = pneg %p43
        %p227 = pneg %p40
        %p228 = pneg %p64
        %p229 = pneg %p61
        %p230 = pneg %p85
        %p231 = pneg %p82
        %p232 = pneg %p106
        %p233 = pneg %p103
        %p234 = pneg %p127
        %p235 = pneg %p124
        %p236 = pneg %p153
        %p237 = pneg %p150
        %s238 = sand.u32 %s140, 1
        %s239 = scalar_lea.sflag [#allocation4], %s238
        %s240 = sand.u32 %s140, 1
        %s241 = smul.addr %s240, 128
        %s242 = scalar_lea.vmem [#allocation5], %s241
        %v243 = vld [vmem:[%s216] sm:$0xff]
        %v244 = vld [vmem:[%s216 + $0x8] sm:$0xff]
        %v245 = vld [vmem:[%s216 + $0x10] sm:$0xff]
        %v246 = vld [vmem:[%s216 + $0x18] sm:$0xff]
        %v247 = vld [vmem:[%s216 + $0x20] sm:$0xff]
        %v248 = vld [vmem:[%s216 + $0x28] sm:$0xff]
        %v249 = vld [vmem:[%s216 + $0x30] sm:$0xff]
        %v250 = vld [vmem:[%s216 + $0x38] sm:$0xff]
        %v251 = vld [vmem:[%s216 + $0x40] sm:$0xff]
        %v252 = vld [vmem:[%s216 + $0x48] sm:$0xff]
        %v253 = vld [vmem:[%s216 + $0x50] sm:$0xff]
        %v254 = vld [vmem:[%s216 + $0x58] sm:$0xff]
        %v255 = vld [vmem:[%s216 + $0x60] sm:$0xff]
        %v256 = vld [vmem:[%s216 + $0x68] sm:$0xff]
        %v257 = vld [vmem:[%s216 + $0x70] sm:$0xff]
        %v258 = vld [vmem:[%s216 + $0x78] sm:$0xff]
        %v259 = vadd.f32 %v243, %v244
        %260 = vadd.xlane.f32.xlu0 %v259
        %v261 = vpop.xlane.xlu0 %260
        %v262 = vadd.f32 %v245, %v246
        %263 = vadd.xlane.f32.xlu0 %v262
        %v264 = vpop.xlane.xlu0 %263
        %v265 = vadd.f32 %v247, %v248
        %266 = vadd.xlane.f32.xlu0 %v265
        %v267 = vpop.xlane.xlu0 %266
        %v268 = vadd.f32 %v249, %v250
        %269 = vadd.xlane.f32.xlu0 %v268
        %v270 = vpop.xlane.xlu0 %269
        %v271 = vadd.f32 %v251, %v252
        %272 = vadd.xlane.f32.xlu0 %v271
        %v273 = vpop.xlane.xlu0 %272
        %v274 = vadd.f32 %v253, %v254
        %275 = vadd.xlane.f32.xlu0 %v274
        %v276 = vpop.xlane.xlu0 %275
        %v277 = vadd.f32 %v255, %v256
        %278 = vadd.xlane.f32.xlu0 %v277
        %v279 = vpop.xlane.xlu0 %278
        %v280 = vadd.f32 %v257, %v258
        %281 = vadd.xlane.f32.xlu0 %v280
        %v282 = vpop.xlane.xlu0 %281
        %v283 = vmax.f32 %v243, %v244
        %284 = vmax.xlane.f32.xlu0 %v283
        %v285 = vpop.xlane.xlu0 %284
        %v286 = vmax.f32 %v245, %v246
        %287 = vmax.xlane.f32.xlu0 %v286
        %v288 = vpop.xlane.xlu0 %287
        %v289 = vmax.f32 %v247, %v248
        %290 = vmax.xlane.f32.xlu0 %v289
        %v291 = vpop.xlane.xlu0 %290
        %v292 = vmax.f32 %v249, %v250
        %293 = vmax.xlane.f32.xlu0 %v292
        %v294 = vpop.xlane.xlu0 %293
        %v295 = vmax.f32 %v251, %v252
        %296 = vmax.xlane.f32.xlu0 %v295
        %v297 = vpop.xlane.xlu0 %296
        %v298 = vmax.f32 %v253, %v254
        %299 = vmax.xlane.f32.xlu0 %v298
        %v300 = vpop.xlane.xlu0 %299
        %v301 = vmax.f32 %v255, %v256
        %302 = vmax.xlane.f32.xlu0 %v301
        %v303 = vpop.xlane.xlu0 %302
        %v304 = vmax.f32 %v257, %v258
        %305 = vmax.xlane.f32.xlu0 %v304
        %v306 = vpop.xlane.xlu0 %305
        %v307 = vmul.f32 %v261, 0.00390625
        %v308 = vmul.f32 %v264, 0.00390625
        %v309 = vmul.f32 %v267, 0.00390625
        %v310 = vmul.f32 %v270, 0.00390625
        %v311 = vmul.f32 %v273, 0.00390625
        %v312 = vmul.f32 %v276, 0.00390625
        %v313 = vmul.f32 %v279, 0.00390625
        %v314 = vmul.f32 %v282, 0.00390625
        %v315 = vld [vmem:[%s1] sm:$0xff]
        %v316 = vld [vmem:[%s1 + $0x8] sm:$0xff]
        %v317 = vld [vmem:[%s1 + $0x10] sm:$0xff]
        %v318 = vld [vmem:[%s1 + $0x18] sm:$0xff]
        %v319 = vld [vmem:[%s1 + $0x20] sm:$0xff]
        %v320 = vld [vmem:[%s1 + $0x28] sm:$0xff]
        %v321 = vld [vmem:[%s1 + $0x30] sm:$0xff]
        %v322 = vld [vmem:[%s1 + $0x38] sm:$0xff]
        %v323 = vld [vmem:[%s2] sm:$0x1]
        %v324 = vld [vmem:[%s3] sm:$0xff]
        %v325 = vld [vmem:[%s3 + $0x8] sm:$0xff]
        %v326 = vld [vmem:[%s3 + $0x10] sm:$0xff]
        %v327 = vld [vmem:[%s3 + $0x18] sm:$0xff]
        %v328 = vld [vmem:[%s3 + $0x20] sm:$0xff]
        %v329 = vld [vmem:[%s3 + $0x28] sm:$0xff]
        %v330 = vld [vmem:[%s3 + $0x30] sm:$0xff]
        %v331 = vld [vmem:[%s3 + $0x38] sm:$0xff]
        %v332 = vld [vmem:[%s4] sm:$0xff]
        %v333 = vld [vmem:[%s4 + $0x8] sm:$0xff]
        %v334 = vld [vmem:[%s4 + $0x10] sm:$0xff]
        %v335 = vld [vmem:[%s4 + $0x18] sm:$0xff]
        %v336 = vld [vmem:[%s4 + $0x20] sm:$0xff]
        %v337 = vld [vmem:[%s4 + $0x28] sm:$0xff]
        %v338 = vld [vmem:[%s4 + $0x30] sm:$0xff]
        %v339 = vld [vmem:[%s4 + $0x38] sm:$0xff]
        %v340 = vmul.f32 %v315, %v307
        %v341 = vmul.f32 %v316, %v308
        %v342 = vmul.f32 %v317, %v309
        %v343 = vmul.f32 %v318, %v310
        %v344 = vmul.f32 %v319, %v311
        %v345 = vmul.f32 %v320, %v312
        %v346 = vmul.f32 %v321, %v313
        %v347 = vmul.f32 %v322, %v314
        %vm348 = vcmask 31744
        %v349 = vsel %vm348, %v340, 0.0
        %v350 = vsel %vm348, %v341, 0.0
        %v351 = vadd.f32 %v349, %v350
        %v352 = vsel %vm348, %v342, 0.0
        %v353 = vadd.f32 %v351, %v352
        %v354 = vsel %vm348, %v343, 0.0
        %v355 = vadd.f32 %v353, %v354
        %v356 = vsel %vm348, %v344, 0.0
        %v357 = vadd.f32 %v355, %v356
        %v358 = vsel %vm348, %v345, 0.0
        %v359 = vadd.f32 %v357, %v358
        %v360 = vsel %vm348, %v346, 0.0
        %v361 = vadd.f32 %v359, %v360
        %v362 = vsel %vm348, %v347, 0.0
        %v363 = vadd.f32 %v361, %v362
        %v364 = vrot.slane %v363, 4
        %v365 = vadd.f32 %v363, %v364
        %v366 = vrot.slane %v365, 2
        %v367 = vadd.f32 %v365, %v366
        %v368 = vrot.slane %v367, 1
        %v369 = vadd.f32 %v367, %v368
        %v370 = vadd.f32 %v369, %v323
        %v371 = vmax.f32 %v370, 0.0
        %v372 = vlaneseq
        %v373 = vshrl.u32 %v372, 7
        %v374 = vsub.s32 0, %v373
        %v375 = vrot.slane %v371, %v374
        %v376 = vmul.f32 %v324, %v375
        %v377 = vmul.f32 %v325, %v375
        %v378 = vmul.f32 %v326, %v375
        %v379 = vmul.f32 %v327, %v375
        %v380 = vmul.f32 %v328, %v375
        %v381 = vmul.f32 %v329, %v375
        %v382 = vmul.f32 %v330, %v375
        %v383 = vmul.f32 %v331, %v375
        %v384 = vsel %vm348, %v376, 0.0
        %385 = vadd.xlane.f32.xlu0 %v384
        %v386 = vpop.xlane.xlu0 %385
        %v387 = vsel %vm348, %v377, 0.0
        %388 = vadd.xlane.f32.xlu0 %v387
        %v389 = vpop.xlane.xlu0 %388
        %v390 = vsel %vm348, %v378, 0.0
        %391 = vadd.xlane.f32.xlu0 %v390
        %v392 = vpop.xlane.xlu0 %391
        %v393 = vsel %vm348, %v379, 0.0
        %394 = vadd.xlane.f32.xlu0 %v393
        %v395 = vpop.xlane.xlu0 %394
        %v396 = vsel %vm348, %v380, 0.0
        %397 = vadd.xlane.f32.xlu0 %v396
        %v398 = vpop.xlane.xlu0 %397
        %v399 = vsel %vm348, %v381, 0.0
        %400 = vadd.xlane.f32.xlu0 %v399
        %v401 = vpop.xlane.xlu0 %400
        %v402 = vsel %vm348, %v382, 0.0
        %403 = vadd.xlane.f32.xlu0 %v402
        %v404 = vpop.xlane.xlu0 %403
        %v405 = vsel %vm348, %v383, 0.0
        %406 = vadd.xlane.f32.xlu0 %v405
        %v407 = vpop.xlane.xlu0 %406
        %v408 = vadd.f32 %v386, %v332
        %v409 = vadd.f32 %v389, %v333
        %v410 = vadd.f32 %v392, %v334
        %v411 = vadd.f32 %v395, %v335
        %v412 = vadd.f32 %v398, %v336
        %v413 = vadd.f32 %v401, %v337
        %v414 = vadd.f32 %v404, %v338
        %v415 = vadd.f32 %v407, %v339
        %v416 = vmul.f32 %v315, %v285
        %v417 = vmul.f32 %v316, %v288
        %v418 = vmul.f32 %v317, %v291
        %v419 = vmul.f32 %v318, %v294
        %v420 = vmul.f32 %v319, %v297
        %v421 = vmul.f32 %v320, %v300
        %v422 = vmul.f32 %v321, %v303
        %v423 = vmul.f32 %v322, %v306
        %v424 = vsel %vm348, %v416, 0.0
        %v425 = vsel %vm348, %v417, 0.0
        %v426 = vadd.f32 %v424, %v425
        %v427 = vsel %vm348, %v418, 0.0
        %v428 = vadd.f32 %v426, %v427
        %v429 = vsel %vm348, %v419, 0.0
        %v430 = vadd.f32 %v428, %v429
        %v431 = vsel %vm348, %v420, 0.0
        %v432 = vadd.f32 %v430, %v431
        %v433 = vsel %vm348, %v421, 0.0
        %v434 = vadd.f32 %v432, %v433
        %v435 = vsel %vm348, %v422, 0.0
        %v436 = vadd.f32 %v434, %v435
        %v437 = vsel %vm348, %v423, 0.0
        %v438 = vadd.f32 %v436, %v437
        %v439 = vrot.slane %v438, 4
        %v440 = vadd.f32 %v438, %v439
        %v441 = vrot.slane %v440, 2
        %v442 = vadd.f32 %v440, %v441
        %v443 = vrot.slane %v442, 1
        %v444 = vadd.f32 %v442, %v443
        %v445 = vadd.f32 %v444, %v323
        %v446 = vmax.f32 %v445, 0.0
        %v447 = vlaneseq
        %v448 = vshrl.u32 %v447, 7
        %v449 = vsub.s32 0, %v448
        %v450 = vrot.slane %v446, %v449
        %v451 = vmul.f32 %v324, %v450
        %v452 = vmul.f32 %v325, %v450
        %v453 = vmul.f32 %v326, %v450
        %v454 = vmul.f32 %v327, %v450
        %v455 = vmul.f32 %v328, %v450
        %v456 = vmul.f32 %v329, %v450
        %v457 = vmul.f32 %v330, %v450
        %v458 = vmul.f32 %v331, %v450
        %v459 = vsel %vm348, %v451, 0.0
        %460 = vadd.xlane.f32.xlu0 %v459
        %v461 = vpop.xlane.xlu0 %460
        %v462 = vsel %vm348, %v452, 0.0
        %463 = vadd.xlane.f32.xlu0 %v462
        %v464 = vpop.xlane.xlu0 %463
        %v465 = vsel %vm348, %v453, 0.0
        %466 = vadd.xlane.f32.xlu0 %v465
        %v467 = vpop.xlane.xlu0 %466
        %v468 = vsel %vm348, %v454, 0.0
        %469 = vadd.xlane.f32.xlu0 %v468
        %v470 = vpop.xlane.xlu0 %469
        %v471 = vsel %vm348, %v455, 0.0
        %472 = vadd.xlane.f32.xlu0 %v471
        %v473 = vpop.xlane.xlu0 %472
        %v474 = vsel %vm348, %v456, 0.0
        %475 = vadd.xlane.f32.xlu0 %v474
        %v476 = vpop.xlane.xlu0 %475
        %v477 = vsel %vm348, %v457, 0.0
        %478 = vadd.xlane.f32.xlu0 %v477
        %v479 = vpop.xlane.xlu0 %478
        %v480 = vsel %vm348, %v458, 0.0
        %481 = vadd.xlane.f32.xlu0 %v480
        %v482 = vpop.xlane.xlu0 %481
        %v483 = vadd.f32 %v461, %v332
        %v484 = vadd.f32 %v464, %v333
        %v485 = vadd.f32 %v467, %v334
        %v486 = vadd.f32 %v470, %v335
        %v487 = vadd.f32 %v473, %v336
        %v488 = vadd.f32 %v476, %v337
        %v489 = vadd.f32 %v479, %v338
        %v490 = vadd.f32 %v482, %v339
        %v491 = vadd.f32 %v408, %v483
        %v492 = vadd.f32 %v409, %v484
        %v493 = vadd.f32 %v410, %v485
        %v494 = vadd.f32 %v411, %v486
        %v495 = vadd.f32 %v412, %v487
        %v496 = vadd.f32 %v413, %v488
        %v497 = vadd.f32 %v414, %v489
        %v498 = vadd.f32 %v415, %v490
        %v499 = vxor.u32 %v491, 2147483648
        %v500 = vxor.u32 %v492, 2147483648
        %v501 = vxor.u32 %v493, 2147483648
        %v502 = vxor.u32 %v494, 2147483648
        %v503 = vxor.u32 %v495, 2147483648
        %v504 = vxor.u32 %v496, 2147483648
        %v505 = vxor.u32 %v497, 2147483648
        %v506 = vxor.u32 %v498, 2147483648
        %v507 = vmul.f32 %v499, 1.442695
        %v508 = vpow.pop %v507
        %v509 = vmul.f32 %v500, 1.442695
        %v510 = vpow.pop %v509
        %v511 = vmul.f32 %v501, 1.442695
        %v512 = vpow.pop %v511
        %v513 = vmul.f32 %v502, 1.442695
        %v514 = vpow.pop %v513
        %v515 = vmul.f32 %v503, 1.442695
        %v516 = vpow.pop %v515
        %v517 = vmul.f32 %v504, 1.442695
        %v518 = vpow.pop %v517
        %v519 = vmul.f32 %v505, 1.442695
        %v520 = vpow.pop %v519
        %v521 = vmul.f32 %v506, 1.442695
        %v522 = vpow.pop %v521
        %v523 = vadd.f32 %v508, 1.0
        %v524 = vadd.f32 %v510, 1.0
        %v525 = vadd.f32 %v512, 1.0
        %v526 = vadd.f32 %v514, 1.0
        %v527 = vadd.f32 %v516, 1.0
        %v528 = vadd.f32 %v518, 1.0
        %v529 = vadd.f32 %v520, 1.0
        %v530 = vadd.f32 %v522, 1.0
        %v531 = vrcp.pop %v523
        %v532 = vmul.f32 1.0, %v531
        %v533 = vrcp.pop %v524
        %v534 = vmul.f32 1.0, %v533
        %v535 = vrcp.pop %v525
        %v536 = vmul.f32 1.0, %v535
        %v537 = vrcp.pop %v526
        %v538 = vmul.f32 1.0, %v537
        %v539 = vrcp.pop %v527
        %v540 = vmul.f32 1.0, %v539
        %v541 = vrcp.pop %v528
        %v542 = vmul.f32 1.0, %v541
        %v543 = vrcp.pop %v529
        %v544 = vmul.f32 1.0, %v543
        %v545 = vrcp.pop %v530
        %v546 = vmul.f32 1.0, %v545
        %548 = vset.pattern.permute.xlu0 0
        %549 = vperm.xlu0 %548, %v532
        %v550 = vpop.permute.xlu0 %549
        %553 = vset.pattern.permute.xlu0 0
        %554 = vperm.xlu0 %553, %v534
        %v555 = vpop.permute.xlu0 %554
        %558 = vset.pattern.permute.xlu0 0
        %559 = vperm.xlu0 %558, %v536
        %v560 = vpop.permute.xlu0 %559
        %563 = vset.pattern.permute.xlu0 0
        %564 = vperm.xlu0 %563, %v538
        %v565 = vpop.permute.xlu0 %564
        %568 = vset.pattern.permute.xlu0 0
        %569 = vperm.xlu0 %568, %v540
        %v570 = vpop.permute.xlu0 %569
        %573 = vset.pattern.permute.xlu0 0
        %574 = vperm.xlu0 %573, %v542
        %v575 = vpop.permute.xlu0 %574
        %578 = vset.pattern.permute.xlu0 0
        %579 = vperm.xlu0 %578, %v544
        %v580 = vpop.permute.xlu0 %579
        %583 = vset.pattern.permute.xlu0 0
        %584 = vperm.xlu0 %583, %v546
        %v585 = vpop.permute.xlu0 %584
        %v587 = vmul.f32 %v243, %v550
        %v588 = vmul.f32 %v244, %v550
        %v589 = vmul.f32 %v245, %v555
        %v590 = vmul.f32 %v246, %v555
        %v591 = vmul.f32 %v247, %v560
        %v592 = vmul.f32 %v248, %v560
        %v593 = vmul.f32 %v249, %v565
        %v594 = vmul.f32 %v250, %v565
        %v595 = vmul.f32 %v251, %v570
        %v596 = vmul.f32 %v252, %v570
        %v597 = vmul.f32 %v253, %v575
        %v598 = vmul.f32 %v254, %v575
        %v599 = vmul.f32 %v255, %v580
        %v600 = vmul.f32 %v256, %v580
        %v601 = vmul.f32 %v257, %v585
        %v602 = vmul.f32 %v258, %v585
        %603 = vst [vmem:[%s242] sm:$0xff] %v587
        %604 = vst [vmem:[%s242 + $0x8] sm:$0xff] %v588
        %605 = vst [vmem:[%s242 + $0x10] sm:$0xff] %v589
        %606 = vst [vmem:[%s242 + $0x18] sm:$0xff] %v590
        %607 = vst [vmem:[%s242 + $0x20] sm:$0xff] %v591
        %608 = vst [vmem:[%s242 + $0x28] sm:$0xff] %v592
        %609 = vst [vmem:[%s242 + $0x30] sm:$0xff] %v593
        %610 = vst [vmem:[%s242 + $0x38] sm:$0xff] %v594
        %611 = vst [vmem:[%s242 + $0x40] sm:$0xff] %v595
        %612 = vst [vmem:[%s242 + $0x48] sm:$0xff] %v596
        %613 = vst [vmem:[%s242 + $0x50] sm:$0xff] %v597
        %614 = vst [vmem:[%s242 + $0x58] sm:$0xff] %v598
        %615 = vst [vmem:[%s242 + $0x60] sm:$0xff] %v599
        %616 = vst [vmem:[%s242 + $0x68] sm:$0xff] %v600
        %617 = vst [vmem:[%s242 + $0x70] sm:$0xff] %v601
        %618 = vst [vmem:[%s242 + $0x78] sm:$0xff] %v602
        %s619 = sand.u32 %s140, 1
        %s620 = scalar_lea.sflag [#allocation4], %s619
        %s621 = sand.u32 %s140, 1
        %s622 = smul.addr %s621, 128
        %s623 = scalar_lea.vmem [#allocation5], %s622
        // Predicated region
        $region45: #{tpu_custom_call.1} parent=39 // pred_check
          %p624 = pneg %p150
        $region46: #{tpu_custom_call.1} parent=39 // pred_check_branch
          %626 = sbr.rel (%p624) target = $region48
        $region47: #{tpu_custom_call.1} parent=39 // pred_region
          %s628 = ssub.s32 2048, 2048
          %629 = vsyncadd %s620, %s628
          %s630 = smul.addr %s22, 16
          %s631 = smul.addr %s630, 128
          %s632 = scalar_lea.hbm %s5, %s631
          %s633 = sshll.u32 %s623, 4
          %s634 = int_to_ptr.vmem [resolvable:$true] %s633
          %639 = dma.vmem_to_hbm [thread:$0]  %s634, 2048, %s632, %s620, 256, 256, 16
        $region48: #{tpu_custom_call.1} parent=39 // pred_fallthru
          _
      $region40: #{tpu_custom_call.1} parent=5 // pred_fallthru
        _
      %p640 = scmp.le.s32.totalorder 2, %s17
      // Predicated region
      $region49: #{tpu_custom_call.1} parent=5 // pred_check
        %p641 = pneg %p640
      $region50: #{tpu_custom_call.1} parent=5 // pred_check_branch
        %643 = sbr.rel (%p641) target = $region52
      $region51: #{tpu_custom_call.1} parent=5 // pred_region
        %s644 = ssub.s32 %s17, 2
        // Predicated region
        $region53: #{tpu_custom_call.1} parent=51 // pred_check
          %p645 = pneg %p156
        $region54: #{tpu_custom_call.1} parent=51 // pred_check_branch
          %647 = sbr.rel (%p645) target = $region56
        $region55: #{tpu_custom_call.1} parent=51 // pred_region
          %s648 = sand.u32 %s141, 1
          %s649 = scalar_lea.sflag [#allocation4], %s648
          %s650 = sand.u32 %s141, 1
          %s651 = smul.addr %s650, 128
          %s652 = scalar_lea.vmem [#allocation5], %s651
          %653 = dma.done %s649, 2048
        $region56: #{tpu_custom_call.1} parent=51 // pred_fallthru
          _
      $region52: #{tpu_custom_call.1} parent=5 // pred_fallthru
        _
    $region6: #{tpu_custom_call.1} parent=1 // loop_footer
      %s21 = sadd.s32 1, %s17
    $region7: #{tpu_custom_call.1} parent=1 // loop_footer_branch
      %16 = sbr.rel target = $region3
    $region8: #{tpu_custom_call.1} parent=1 // loop_exit
      _
    %654 = vsyncpa [#allocation3], 1
    %s655 = scalar_lea.sflag [#allocation3], 1
    %656 = vsyncpa %s655, 1
    %657 = vsyncpa [#allocation4], 1
    %s658 = scalar_lea.sflag [#allocation4], 1
    %659 = vsyncpa %s658, 1

</llo_original>
